<compile_context>
chip_gen: v6e
topology: v6e:2x2x1
jax: 0.10.0
libtpu: 0.0.40
codegen_flags: <defaults>
</compile_context>

<pallas_src>
import jax
import jax.numpy as jnp
from jax.experimental import pallas as pl
from jax.experimental.pallas import tpu as pltpu


# --------------------------------------------------------------------------
# Fused kernel: out = x + gamma * (loc_emb @ Wv^T + bv), broadcast over H*W
# --------------------------------------------------------------------------
def _fused_kernel(e_ref, w_ref, b_ref, g_ref, x_ref, o_ref):
    """
    e_ref : (B, E)       whole array, VMEM   -- loc_emb
    w_ref : (C, E)       whole array, VMEM   -- value_fc weight (PyTorch layout)
    b_ref : (C, 1)       whole array, VMEM   -- value_fc bias
    g_ref : (1, 1)       whole array, SMEM   -- gamma scalar
    x_ref : (1, C, THW)  spatial tile
    o_ref : (1, C, THW)  spatial tile
    """
    b = pl.program_id(0)
    emb = e_ref[pl.ds(b, 1), :]                                        # (1, E)
    # value_fc for batch b.  C and E are tiny, so a VPU broadcast-multiply plus
    # an XLU lane reduce beats driving the MXU, and the result lands directly
    # in the (C, 1) orientation needed for a pure lane broadcast below.
    val = jnp.sum(w_ref[...] * emb, axis=-1, keepdims=True) + b_ref[...]  # (C, 1)
    gv = g_ref[0, 0] * val                                             # (C, 1) f32
    # Broadcast-add along the lane (H*W) axis; add in f32, cast on store.
    o_ref[...] = (x_ref[...].astype(jnp.float32) + gv).astype(o_ref.dtype)


# --------------------------------------------------------------------------
# Tiling / chip heuristics
# --------------------------------------------------------------------------
def _chip_budgets():
    """(target block bytes, vmem_limit_bytes) per TPU generation."""
    try:
        kind = jax.devices()[0].device_kind.lower()
    except Exception:
        kind = ""
    if "v5 lite" in kind or "v5e" in kind:
        return 2 << 20, 32 << 20   # modest tiles; raise scoped VMEM past 16 MiB default
    if "v7" in kind:
        return 8 << 20, 48 << 20   # 3.2 TB/s HBM: bigger tiles, stay well under 64 MiB VMEM
    return 4 << 20, 32 << 20       # v6e and safe default


def _pick_spatial_tile(hw, c, itemsize, batch, block_bytes, min_lanes=512):
    """Lane tile for the H*W axis: a multiple of 128 (or the full extent),
    sized to the per-generation block-byte budget, never degenerate-small."""
    lane_budget = (block_bytes // max(1, c * itemsize)) // 128 * 128
    lane_budget = max(min_lanes, lane_budget)
    if hw <= lane_budget:
        thw = hw                      # single full-extent block (always a legal block shape)
    else:
        thw = lane_budget             # default: pl.cdiv grid with a masked ragged edge
        t = lane_budget
        while t >= min_lanes:         # prefer an exact divisor if one exists
            if hw % t == 0:
                thw = t
                break
            t -= 128
    # v7x megacore: ensure >= 2 parallel grid steps when B == 1.
    if batch == 1 and thw >= hw and hw >= 2 * min_lanes:
        thw = -(-((hw + 1) // 2) // 128) * 128
    return thw


# --------------------------------------------------------------------------
# Wrapper
# --------------------------------------------------------------------------
def cross_attention_forward(params, x, loc_emb):
    """CrossAttentionBlock.forward.

    x       : (B, C, H, W)  NCHW, matching the PyTorch module.
    loc_emb : (B, E)
    returns : (B, C, H, W)
    """
    B, C, H, W = x.shape
    HW = H * W
    E = loc_emb.shape[-1]

    wv = params["value_fc_w"].astype(jnp.float32)                    # (C, E)
    bv = params["value_fc_b"].reshape(C, 1).astype(jnp.float32)      # (C, 1)
    gamma = jnp.reshape(params["gamma"], (1, 1)).astype(jnp.float32)

    # Contiguous NCHW -> (B, C, HW) is a free reshape; H*W sits on the lane axis
    # so loads/stores are lane dense and gv broadcasts purely along lanes.
    x3 = x.reshape(B, C, HW)

    block_bytes, vmem_limit = _chip_budgets()
    thw = _pick_spatial_tile(HW, C, x.dtype.itemsize, B, block_bytes)
    grid = (B, pl.cdiv(HW, thw))

    cost = pl.CostEstimate(
        flops=B * C * HW + grid[0] * grid[1] * (2 * C * E + 2 * C),
        transcendentals=0,
        bytes_accessed=2 * B * C * HW * x.dtype.itemsize,
    )

    out = pl.pallas_call(
        _fused_kernel,
        grid=grid,
        in_specs=[
            pl.BlockSpec((B, E), lambda b, t: (0, 0)),                # loc_emb (whole)
            pl.BlockSpec((C, E), lambda b, t: (0, 0)),                # Wv      (whole)
            pl.BlockSpec((C, 1), lambda b, t: (0, 0)),                # bv      (whole)
            pl.BlockSpec((1, 1), lambda b, t: (0, 0),
                         memory_space=pltpu.MemorySpace.SMEM),        # gamma (scalar)
            pl.BlockSpec((1, C, thw), lambda b, t: (b, 0, t)),        # x tile
        ],
        out_specs=pl.BlockSpec((1, C, thw), lambda b, t: (b, 0, t)),
        out_shape=jax.ShapeDtypeStruct((B, C, HW), x.dtype),
        compiler_params=pltpu.CompilerParams(
            dimension_semantics=("parallel", "parallel"),
            vmem_limit_bytes=vmem_limit),
        cost_estimate=cost,
        # TODO(synk): if the caller donates x (residual input dead after this
        # block), add input_output_aliases={4: 0} to write the sum in place.
    )(loc_emb.astype(jnp.float32), wv, bv, gamma, x3)
    return out.reshape(B, C, H, W)


# --------------------------------------------------------------------------
# Pure-JAX reference of the FULL (un-simplified) PyTorch math, used to verify
# that eliding the dead query/key/softmax path is numerically equivalent.
# --------------------------------------------------------------------------
def cross_attention_reference(params, x, loc_emb):
    B, C, H, W = x.shape
    wq = params["query_conv_w"].reshape(C, C)                 # (Cout, Cin)
    bq = params["query_conv_b"]
    q = jnp.einsum("bchw,oc->bohw", x, wq,
                   precision=jax.lax.Precision.HIGHEST) + bq[None, :, None, None]
    query = q.reshape(B, C, H * W).transpose(0, 2, 1)         # (B, HW, C)
    key = jnp.dot(loc_emb, params["key_fc_w"].T,
                  precision=jax.lax.Precision.HIGHEST) + params["key_fc_b"]
    value = jnp.dot(loc_emb, params["value_fc_w"].T,
                    precision=jax.lax.Precision.HIGHEST) + params["value_fc_b"]
    energy = jnp.einsum("bqc,bc->bq", query, key)[..., None] / (C ** 0.5)
    attn = jax.nn.softmax(energy, axis=2)                     # size-1 axis -> 1.0
    out = attn * value[:, None, :]                            # (B, HW, C)
    out = out.transpose(0, 2, 1).reshape(B, C, H, W)
    return params["gamma"] * out + x


# --------------------------------------------------------------------------
# Demo
# --------------------------------------------------------------------------
if __name__ == "__main__":
    B, C, H, W, E = 2, 4, 16, 16, 32

    key = jax.random.PRNGKey(0)
    ks = jax.random.split(key, 8)
    params = {
        # query_conv / key_fc params are part of the module but are provably
        # dead compute (softmax over a size-1 key axis); kept only so the
        # reference check exercises the full original math.
        "query_conv_w": 0.05 * jax.random.normal(ks[0], (C, C, 1, 1), jnp.float32),
        "query_conv_b": 0.02 * jax.random.normal(ks[1], (C,), jnp.float32),
        "key_fc_w": 0.05 * jax.random.normal(ks[2], (C, E), jnp.float32),
        "key_fc_b": 0.02 * jax.random.normal(ks[3], (C,), jnp.float32),
        "value_fc_w": 0.05 * jax.random.normal(ks[4], (C, E), jnp.float32),
        "value_fc_b": 0.02 * jax.random.normal(ks[5], (C,), jnp.float32),
        # PyTorch inits gamma to 0 (output == x); nonzero here so the value
        # path is actually exercised by the check.
        "gamma": jnp.full((1,), 0.7, jnp.float32),
    }

    x = jax.random.normal(ks[6], (B, C, H, W), jnp.float32)
    loc_emb = jax.random.normal(ks[7], (B, E), jnp.float32)

    out = jax.jit(cross_attention_forward)(params, x, loc_emb)
    jax.block_until_ready(out)

    assert out.shape == (B, C, H, W), out.shape
    assert out.dtype == jnp.float32

    ref = cross_attention_reference(params, x, loc_emb)
    max_err = float(jnp.max(jnp.abs(out - ref)))
    assert jnp.allclose(out, ref, rtol=1e-3, atol=1e-3), max_err

    print("KERNEL_OK")
</pallas_src>

<mosaic_0001>
module attributes {stable_mosaic.version = 11 : i64} {
  func.func @_fused_kernel(%arg0: i32, %arg1: i32, %arg2: memref<2x32xf32, #tpu.memory_space<vmem>>, %arg3: memref<4x32xf32, #tpu.memory_space<vmem>>, %arg4: memref<4x1xf32, #tpu.memory_space<vmem>>, %arg5: memref<1x1xf32, #tpu.memory_space<smem>>, %arg6: memref<1x4x256xf32, #tpu.memory_space<vmem>>, %arg7: memref<1x4x256xf32, #tpu.memory_space<vmem>>) attributes {dimension_semantics = [#tpu.dimension_semantics<parallel>, #tpu.dimension_semantics<parallel>], iteration_bounds = array<i64: 2, 1>, scalar_prefetch = 0 : i64, scratch_operands = 0 : i64, tpu.core_type = #tpu.core_type<tc>, window_params = [{pipeline_mode = #tpu.pipeline_mode<synchronous>, transform_indices = @transform_0, window_bounds = array<i64: 2, 32>}, {pipeline_mode = #tpu.pipeline_mode<synchronous>, transform_indices = @transform_1, window_bounds = array<i64: 4, 32>}, {pipeline_mode = #tpu.pipeline_mode<synchronous>, transform_indices = @transform_2, window_bounds = array<i64: 4, 1>}, {transform_indices = @transform_3, window_bounds = array<i64: 1, 1>}, {transform_indices = @transform_4, window_bounds = array<i64: 1, 4, 256>}, {transform_indices = @transform_5, window_bounds = array<i64: 1, 4, 256>}]} {
    %0 = arith.index_cast %arg0 : i32 to index
    %c0 = arith.constant 0 : index
    %1 = vector.load %arg2[%0, %c0] : memref<2x32xf32, #tpu.memory_space<vmem>>, vector<1x32xf32>
    %c0_0 = arith.constant 0 : index
    %c0_1 = arith.constant 0 : index
    %2 = vector.load %arg3[%c0_0, %c0_1] : memref<4x32xf32, #tpu.memory_space<vmem>>, vector<4x32xf32>
    %3 = vector.broadcast %1 : vector<1x32xf32> to vector<4x32xf32>
    %4 = arith.mulf %2, %3 : vector<4x32xf32>
    %cst = arith.constant dense<0.000000e+00> : vector<4xf32>
    %5 = vector.multi_reduction <add>, %4, %cst [1] : vector<4x32xf32> to vector<4xf32>
    %6 = vector.shape_cast %5 : vector<4xf32> to vector<4x1xf32>
    %c0_2 = arith.constant 0 : index
    %c0_3 = arith.constant 0 : index
    %7 = vector.load %arg4[%c0_2, %c0_3] : memref<4x1xf32, #tpu.memory_space<vmem>>, vector<4x1xf32>
    %8 = arith.addf %6, %7 : vector<4x1xf32>
    %c0_4 = arith.constant 0 : index
    %c0_5 = arith.constant 0 : index
    %9 = memref.load %arg5[%c0_4, %c0_5] : memref<1x1xf32, #tpu.memory_space<smem>>
    %10 = vector.broadcast %9 : f32 to vector<4x1xf32>
    %11 = arith.mulf %10, %8 : vector<4x1xf32>
    %c0_6 = arith.constant 0 : index
    %c0_7 = arith.constant 0 : index
    %c0_8 = arith.constant 0 : index
    %12 = vector.load %arg6[%c0_6, %c0_7, %c0_8] : memref<1x4x256xf32, #tpu.memory_space<vmem>>, vector<1x4x256xf32>
    %13 = vector.shape_cast %11 : vector<4x1xf32> to vector<1x4x1xf32>
    %14 = vector.broadcast %13 : vector<1x4x1xf32> to vector<1x4x256xf32>
    %15 = arith.addf %12, %14 : vector<1x4x256xf32>
    %c0_9 = arith.constant 0 : index
    %c0_10 = arith.constant 0 : index
    %c0_11 = arith.constant 0 : index
    %16 = vector.load %arg7[%c0_9, %c0_10, %c0_11] : memref<1x4x256xf32, #tpu.memory_space<vmem>>, vector<1x4x256xf32>
    tpu.vector_store %arg7[%c0_9, %c0_10, %c0_11], %15 {strides = array<i32>} : memref<1x4x256xf32, #tpu.memory_space<vmem>>, vector<1x4x256xf32>,
    return
  }
  func.func @transform_0(%arg0: i32, %arg1: i32) -> (i32, i32) {
    %c0_i32 = arith.constant 0 : i32
    %c0_i32_0 = arith.constant 0 : i32
    %c0_i32_1 = arith.constant 0 : i32
    return %c0_i32, %c0_i32_0 : i32, i32
  }
  func.func @transform_1(%arg0: i32, %arg1: i32) -> (i32, i32) {
    %c0_i32 = arith.constant 0 : i32
    %c0_i32_0 = arith.constant 0 : i32
    %c0_i32_1 = arith.constant 0 : i32
    return %c0_i32, %c0_i32_0 : i32, i32
  }
  func.func @transform_2(%arg0: i32, %arg1: i32) -> (i32, i32) {
    %c0_i32 = arith.constant 0 : i32
    %c0_i32_0 = arith.constant 0 : i32
    %c0_i32_1 = arith.constant 0 : i32
    return %c0_i32, %c0_i32_0 : i32, i32
  }
  func.func @transform_3(%arg0: i32, %arg1: i32) -> (i32, i32) {
    %c0_i32 = arith.constant 0 : i32
    %c0_i32_0 = arith.constant 0 : i32
    %c0_i32_1 = arith.constant 0 : i32
    return %c0_i32, %c0_i32_0 : i32, i32
  }
  func.func @transform_4(%arg0: i32, %arg1: i32) -> (i32, i32, i32) {
    %c0_i32 = arith.constant 0 : i32
    %c0_i32_0 = arith.constant 0 : i32
    return %arg0, %c0_i32, %arg1 : i32, i32, i32
  }
  func.func @transform_5(%arg0: i32, %arg1: i32) -> (i32, i32, i32) {
    %c0_i32 = arith.constant 0 : i32
    %c0_i32_0 = arith.constant 0 : i32
    return %arg0, %c0_i32, %arg1 : i32, i32, i32
  }
}

</mosaic_0001>

<llo_original>
// kernel: cross_attention_forward.1
$region0: #{cross_attention_forward.1}
  #allocation0 [shape = 'u32[]', space=smem, size = 0x4, offset = 0x4, fixed_abs, tag = 'smem constant byte address 0x4 - core index']
  #allocation1 [shape = 'u32[144,128]{1,0:T(1,128)}', space=vmem, size = 0x12000, scoped, tag = 'internal scratch']
  #allocation2 [shape = 'f32[1,1]{1,0:T(1,128)S(6)}', space=smem, size = 0x200, scoped, tag = 'scoped memory for cross_attention_forward.1']
  %s0 = inlined_call_operand.vmem [shape: f32[2,32], index: 0, kind: input, shape index: {}]
  %s1 = inlined_call_operand.vmem [shape: f32[4,32], index: 1, kind: input, shape index: {}]
  %s2 = inlined_call_operand.vmem [shape: f32[4,1], index: 2, kind: input, shape index: {}]
  %s3 = inlined_call_operand.<no memory space> [shape: f32[1,1], index: 3, kind: input, shape index: {}]
  %s4 = inlined_call_operand.vmem [shape: f32[2,4,256], index: 4, kind: input, shape index: {}]
  %s5 = inlined_call_operand.vmem [shape: f32[2,4,256], index: 5, kind: output, shape index: {}]
  %s6 = sld [smem:[#allocation0]]
  $region53: #{cross_attention_forward.1} parent=0
    _
  %s8 = ssub.s32 1, %s6
  %s9 = scalar_select 0, %s8, %s6
  %10 = sst [smem:[#allocation2]] %s3
  loop: start=0, step=1, limit=4
  $region2: #{cross_attention_forward.1} parent=0 // loop_pre_header
    _
  $region3: #{cross_attention_forward.1} parent=0 // loop_header
    %s12 = sphi 0, %s16
    %p13 = scmp.ge.s32.totalorder %s12, 4
    %s19 = sphi 0, %s31
    %s20 = sphi 0, %s27
    %s21 = sphi 0, %s19
    %s22 = sphi 0, %s20
    %s23 = sphi 0, %s21
    %s24 = sphi 0, %s22
    %s32 = sphi 0, %s32
    %s34 = sphi 0, %s32
    %s35 = sphi 0, %s34
    %s49 = sphi 0, %s35
    %s53 = sphi 0, %s53
    %s55 = sphi 0, %s53
    %s56 = sphi 0, %s55
    %s70 = sphi 0, %s56
    %s74 = sphi 0, %s74
    %s76 = sphi 0, %s74
    %s77 = sphi 0, %s76
    %s91 = sphi 0, %s77
    %s95 = sphi 0, %s95
    %s97 = sphi 0, %s95
    %s98 = sphi 0, %s97
    %s112 = sphi 0, %s98
    %s120 = sphi 0, %s122
    %s123 = sphi 0, %s120
    %s124 = sphi 0, %s123
    %s140 = sphi 0, %s124
    %s148 = sphi 0, %s150
    %s151 = sphi 0, %s148
    %s152 = sphi 0, %s151
    %s168 = sphi 0, %s152
  $region4: #{cross_attention_forward.1} parent=0 // loop_header_branch
    %15 = sbr.rel (%p13) target = $region8
  $region5: #{cross_attention_forward.1} parent=0 // loop_body
    %s17 = ssub.s32 %s12, 1
    %s18 = ssub.s32 %s12, 2
    %s25 = sadd.s32 1, %s20
    %p26 = scmp.ge.s32.totalorder %s25, 1
    %s27 = scalar_select %p26, 0, %s25
    %s28 = sadd.s32 1, %s19
    %s29 = scalar_select %p26, %s28, %s19
    %p30 = scmp.ge.s32.totalorder %s29, 2
    %s31 = scalar_select %p30, 0, %s29
    %s33 = sadd.s32 %s32, 1
    %p36 = scmp.eq.s32.totalorder %s12, 1
    %p37 = scmp.ne.s32.totalorder %s32, %s34
    %p38 = scmp.eq.s32.totalorder %s12, 0
    %p39 = por %p37, %p38
    %p40 = scmp.ne.s32.totalorder %s32, %s34
    %p41 = scmp.eq.s32.totalorder %s17, 1
    %p42 = por %p40, %p41
    %p43 = scmp.ne.s32.totalorder %s34, %s35
    %p44 = scmp.eq.s32.totalorder %s17, 0
    %p45 = por %p43, %p44
    %p46 = scmp.ne.s32.totalorder %s34, %s35
    %p47 = scmp.eq.s32.totalorder %s18, 1
    %p48 = por %p46, %p47
    %p50 = scmp.ne.s32.totalorder %s35, %s49
    %p51 = scmp.eq.s32.totalorder %s18, 0
    %p52 = por %p50, %p51
    %s54 = sadd.s32 %s53, 1
    %p57 = scmp.eq.s32.totalorder %s12, 1
    %p58 = scmp.ne.s32.totalorder %s53, %s55
    %p59 = scmp.eq.s32.totalorder %s12, 0
    %p60 = por %p58, %p59
    %p61 = scmp.ne.s32.totalorder %s53, %s55
    %p62 = scmp.eq.s32.totalorder %s17, 1
    %p63 = por %p61, %p62
    %p64 = scmp.ne.s32.totalorder %s55, %s56
    %p65 = scmp.eq.s32.totalorder %s17, 0
    %p66 = por %p64, %p65
    %p67 = scmp.ne.s32.totalorder %s55, %s56
    %p68 = scmp.eq.s32.totalorder %s18, 1
    %p69 = por %p67, %p68
    %p71 = scmp.ne.s32.totalorder %s56, %s70
    %p72 = scmp.eq.s32.totalorder %s18, 0
    %p73 = por %p71, %p72
    %s75 = sadd.s32 %s74, 1
    %p78 = scmp.eq.s32.totalorder %s12, 1
    %p79 = scmp.ne.s32.totalorder %s74, %s76
    %p80 = scmp.eq.s32.totalorder %s12, 0
    %p81 = por %p79, %p80
    %p82 = scmp.ne.s32.totalorder %s74, %s76
    %p83 = scmp.eq.s32.totalorder %s17, 1
    %p84 = por %p82, %p83
    %p85 = scmp.ne.s32.totalorder %s76, %s77
    %p86 = scmp.eq.s32.totalorder %s17, 0
    %p87 = por %p85, %p86
    %p88 = scmp.ne.s32.totalorder %s76, %s77
    %p89 = scmp.eq.s32.totalorder %s18, 1
    %p90 = por %p88, %p89
    %p92 = scmp.ne.s32.totalorder %s77, %s91
    %p93 = scmp.eq.s32.totalorder %s18, 0
    %p94 = por %p92, %p93
    %s96 = sadd.s32 %s95, 1
    %p99 = scmp.eq.s32.totalorder %s12, 1
    %p100 = scmp.ne.s32.totalorder %s95, %s97
    %p101 = scmp.eq.s32.totalorder %s12, 0
    %p102 = por %p100, %p101
    %p103 = scmp.ne.s32.totalorder %s95, %s97
    %p104 = scmp.eq.s32.totalorder %s17, 1
    %p105 = por %p103, %p104
    %p106 = scmp.ne.s32.totalorder %s97, %s98
    %p107 = scmp.eq.s32.totalorder %s17, 0
    %p108 = por %p106, %p107
    %p109 = scmp.ne.s32.totalorder %s97, %s98
    %p110 = scmp.eq.s32.totalorder %s18, 1
    %p111 = por %p109, %p110
    %p113 = scmp.ne.s32.totalorder %s98, %s112
    %p114 = scmp.eq.s32.totalorder %s18, 0
    %p115 = por %p113, %p114
    %s116 = ssub.s32 %s19, %s31
    %s117 = ssub.s32 %s20, %s27
    %s118 = sor.u32 %s116, %s117
    %p119 = scmp.eq.s32.totalorder %s118, 0
    %s121 = sadd.s32 %s120, 1
    %s122 = scalar_select %p119, %s120, %s121
    %p125 = pneg %p119
    %p126 = scmp.eq.s32.totalorder %s12, 1
    %p127 = por %p125, %p126
    %p128 = scmp.ne.s32.totalorder %s120, %s123
    %p129 = scmp.eq.s32.totalorder %s12, 0
    %p130 = por %p128, %p129
    %p131 = scmp.ne.s32.totalorder %s120, %s123
    %p132 = scmp.eq.s32.totalorder %s17, 1
    %p133 = por %p131, %p132
    %p134 = scmp.ne.s32.totalorder %s123, %s124
    %p135 = scmp.eq.s32.totalorder %s17, 0
    %p136 = por %p134, %p135
    %p137 = scmp.ne.s32.totalorder %s123, %s124
    %p138 = scmp.eq.s32.totalorder %s18, 1
    %p139 = por %p137, %p138
    %p141 = scmp.ne.s32.totalorder %s124, %s140
    %p142 = scmp.eq.s32.totalorder %s18, 0
    %p143 = por %p141, %p142
    %s144 = ssub.s32 %s19, %s31
    %s145 = ssub.s32 %s20, %s27
    %s146 = sor.u32 %s144, %s145
    %p147 = scmp.eq.s32.totalorder %s146, 0
    %s149 = sadd.s32 %s148, 1
    %s150 = scalar_select %p147, %s148, %s149
    %p153 = pneg %p147
    %p154 = scmp.eq.s32.totalorder %s12, 1
    %p155 = por %p153, %p154
    %p156 = scmp.ne.s32.totalorder %s148, %s151
    %p157 = scmp.eq.s32.totalorder %s12, 0
    %p158 = por %p156, %p157
    %p159 = scmp.ne.s32.totalorder %s148, %s151
    %p160 = scmp.eq.s32.totalorder %s17, 1
    %p161 = por %p159, %p160
    %p162 = scmp.ne.s32.totalorder %s151, %s152
    %p163 = scmp.eq.s32.totalorder %s17, 0
    %p164 = por %p162, %p163
    %p165 = scmp.ne.s32.totalorder %s151, %s152
    %p166 = scmp.eq.s32.totalorder %s18, 1
    %p167 = por %p165, %p166
    %p169 = scmp.ne.s32.totalorder %s152, %s168
    %p170 = scmp.eq.s32.totalorder %s18, 0
    %p171 = por %p169, %p170
    %p172 = scmp.le.s32.totalorder 1, %s12
    %p173 = scmp.lt.s32.totalorder %s12, 3
    %p174 = pnand %p172, %p173
    %p175 = pneg %p174
    // Predicated region
    $region9: #{cross_attention_forward.1} parent=5 // pred_check
      _
    $region10: #{cross_attention_forward.1} parent=5 // pred_check_branch
      %177 = sbr.rel (%p174) target = $region12
    $region11: #{cross_attention_forward.1} parent=5 // pred_region
      %s178 = ssub.s32 %s12, 1
      // Predicated region
      $region13: #{cross_attention_forward.1} parent=11 // pred_check
        %p179 = pneg %p45
      $region14: #{cross_attention_forward.1} parent=11 // pred_check_branch
        %181 = sbr.rel (%p179) target = $region16
      $region15: #{cross_attention_forward.1} parent=11 // pred_region
        _
      $region16: #{cross_attention_forward.1} parent=11 // pred_fallthru
        _
      // Predicated region
      $region17: #{cross_attention_forward.1} parent=11 // pred_check
        %p182 = pneg %p66
      $region18: #{cross_attention_forward.1} parent=11 // pred_check_branch
        %184 = sbr.rel (%p182) target = $region20
      $region19: #{cross_attention_forward.1} parent=11 // pred_region
        _
      $region20: #{cross_attention_forward.1} parent=11 // pred_fallthru
        _
      // Predicated region
      $region21: #{cross_attention_forward.1} parent=11 // pred_check
        %p185 = pneg %p87
      $region22: #{cross_attention_forward.1} parent=11 // pred_check_branch
        %187 = sbr.rel (%p185) target = $region24
      $region23: #{cross_attention_forward.1} parent=11 // pred_region
        _
      $region24: #{cross_attention_forward.1} parent=11 // pred_fallthru
        _
      // Predicated region
      $region25: #{cross_attention_forward.1} parent=11 // pred_check
        %p188 = pneg %p108
      $region26: #{cross_attention_forward.1} parent=11 // pred_check_branch
        %190 = sbr.rel (%p188) target = $region28
      $region27: #{cross_attention_forward.1} parent=11 // pred_region
        _
      $region28: #{cross_attention_forward.1} parent=11 // pred_fallthru
        _
    $region12: #{cross_attention_forward.1} parent=5 // pred_fallthru
      _
    %p191 = scmp.lt.s32.totalorder %s12, 2
    // Predicated region
    $region29: #{cross_attention_forward.1} parent=5 // pred_check
      %p192 = pneg %p191
    $region30: #{cross_attention_forward.1} parent=5 // pred_check_branch
      %194 = sbr.rel (%p192) target = $region32
    $region31: #{cross_attention_forward.1} parent=5 // pred_region
      // Predicated region
      $region33: #{cross_attention_forward.1} parent=31 // pred_check
        %p195 = pneg %p130
      $region34: #{cross_attention_forward.1} parent=31 // pred_check_branch
        %197 = sbr.rel (%p195) target = $region36
      $region35: #{cross_attention_forward.1} parent=31 // pred_region
        %s198 = smul.u32 2, %s20
        %p199 = scmp.lt.s32.totalorder %s19, 1
        %s200 = scalar_select %p199, %s19, 1
        %p201 = scmp.lt.s32.totalorder %s198, 1
        %s202 = scalar_select %p201, %s198, 1
        %s203 = smul.addr %s200, 2
        %s204 = sadd.s32 %s202, %s203
        %s205 = smul.addr %s204, 4
        %s206 = scalar_lea.vmem %s4, %s205
        %s207 = smul.u32 2, %s20
      $region36: #{cross_attention_forward.1} parent=31 // pred_fallthru
        _
    $region32: #{cross_attention_forward.1} parent=5 // pred_fallthru
      _
    %p208 = scmp.le.s32.totalorder 1, %s12
    %p209 = scmp.lt.s32.totalorder %s12, 3
    %p210 = pnand %p208, %p209
    %p211 = pneg %p210
    // Predicated region
    $region37: #{cross_attention_forward.1} parent=5 // pred_check
      _
    $region38: #{cross_attention_forward.1} parent=5 // pred_check_branch
      %213 = sbr.rel (%p210) target = $region40
    $region39: #{cross_attention_forward.1} parent=5 // pred_region
      %s214 = ssub.s32 %s12, 1
      %p215 = pneg %p45
      %p216 = pneg %p42
      %p217 = pneg %p66
      %p218 = pneg %p63
      %p219 = pneg %p87
      %p220 = pneg %p84
      %p221 = pneg %p108
      %p222 = pneg %p105
      %s223 = smul.u32 2, %s22
      %p224 = scmp.lt.s32.totalorder %s21, 1
      %s225 = scalar_select %p224, %s21, 1
      %p226 = scmp.lt.s32.totalorder %s223, 1
      %s227 = scalar_select %p226, %s223, 1
      %s228 = smul.addr %s225, 2
      %s229 = sadd.s32 %s227, %s228
      %s230 = smul.addr %s229, 4
      %s231 = scalar_lea.vmem %s4, %s230
      %p232 = pneg %p136
      %p233 = pneg %p133
      %p234 = pneg %p164
      %p235 = pneg %p161
      %s236 = smul.u32 2, %s22
      %p237 = scmp.lt.s32.totalorder %s21, 1
      %s238 = scalar_select %p237, %s21, 1
      %p239 = scmp.lt.s32.totalorder %s236, 1
      %s240 = scalar_select %p239, %s236, 1
      %s241 = smul.addr %s238, 2
      %s242 = sadd.s32 %s240, %s241
      %s243 = smul.addr %s242, 4
      %s244 = scalar_lea.vmem %s5, %s243
      %s245 = smul.u32 2, %s22
      %p246 = scmp.lt.s32.totalorder %s21, 1
      %s247 = scalar_select %p246, %s21, 1
      %p248 = scmp.lt.s32.totalorder %s245, 1
      %s249 = scalar_select %p248, %s245, 1
      %s250 = smul.addr %s247, 2
      %s251 = sadd.s32 %s249, %s250
      %s252 = smul.addr %s251, 4
      %s253 = scalar_lea.vmem %s4, %s252
      %s254 = smul.u32 2, %s22
      %s255 = smul.u32 2, %s22
      %p256 = scmp.lt.s32.totalorder %s21, 1
      %s257 = scalar_select %p256, %s21, 1
      %p258 = scmp.lt.s32.totalorder %s255, 1
      %s259 = scalar_select %p258, %s255, 1
      %s260 = smul.addr %s257, 2
      %s261 = sadd.s32 %s259, %s260
      %s262 = smul.addr %s261, 4
      %s263 = scalar_lea.vmem %s5, %s262
      %s264 = smul.u32 2, %s22
      %s265 = scalar_lea.vmem %s0, %s21
      %v266 = vld [vmem:[%s265] sm:$0x1]
      %v267 = vld [vmem:[%s1] sm:$0xf]
      %v268 = vlaneseq
      %v269 = vshrl.u32 %v268, 7
      %v270 = vsub.s32 0, %v269
      %v271 = vrot.slane %v266, %v270
      %v272 = vmul.f32 %v267, %v271
      %vm273 = vcmask 257024
      %v274 = vsel %vm273, %v272, 0.0
      %275 = vadd.xlane.f32.xlu0 %v274
      %v276 = vpop.xlane.xlu0 %275
      %v277 = vld [vmem:[%s2] sm:$0xf]
      %v278 = vadd.f32 %v276, %v277
      %s279 = sld [smem:[#allocation2]]
      %v280 = vstv %s279
      %v281 = vmul.f32 %v280, %v278
      %v282 = vld [vmem:[%s253] sm:$0xff]
      %284 = vset.pattern.permute.xlu0 0
      %285 = vperm.xlu0 %284, %v281
      %v286 = vpop.permute.xlu0 %285
      %v288 = vunpack.c.l.s4 839922192
      %v289 = vunpack.c.0.s8 %v288
      %v290 = vlaneseq
      %v291 = vshrl.u32 %v290, 7
      %v292 = vsub.s32 %v289, %v291
      %v293 = vrot.slane %v286, %v292
      %v295 = vadd.f32 %v282, %v293
      %296 = vst [vmem:[%s263] sm:$0xff] %v295
      %s297 = smul.u32 2, %s22
      %p298 = scmp.lt.s32.totalorder %s21, 1
      %s299 = scalar_select %p298, %s21, 1
      %p300 = scmp.lt.s32.totalorder %s297, 1
      %s301 = scalar_select %p300, %s297, 1
      %s302 = smul.addr %s299, 2
      %s303 = sadd.s32 %s301, %s302
      %s304 = smul.addr %s303, 4
      %s305 = scalar_lea.vmem %s5, %s304
      // Predicated region
      $region41: #{cross_attention_forward.1} parent=39 // pred_check
        %p306 = pneg %p161
      $region42: #{cross_attention_forward.1} parent=39 // pred_check_branch
        %308 = sbr.rel (%p306) target = $region44
      $region43: #{cross_attention_forward.1} parent=39 // pred_region
        %s309 = smul.u32 2, %s22
      $region44: #{cross_attention_forward.1} parent=39 // pred_fallthru
        _
    $region40: #{cross_attention_forward.1} parent=5 // pred_fallthru
      _
    %p310 = scmp.le.s32.totalorder 2, %s12
    // Predicated region
    $region45: #{cross_attention_forward.1} parent=5 // pred_check
      %p311 = pneg %p310
    $region46: #{cross_attention_forward.1} parent=5 // pred_check_branch
      %313 = sbr.rel (%p311) target = $region48
    $region47: #{cross_attention_forward.1} parent=5 // pred_region
      %s314 = ssub.s32 %s12, 2
      // Predicated region
      $region49: #{cross_attention_forward.1} parent=47 // pred_check
        %p315 = pneg %p167
      $region50: #{cross_attention_forward.1} parent=47 // pred_check_branch
        %317 = sbr.rel (%p315) target = $region52
      $region51: #{cross_attention_forward.1} parent=47 // pred_region
        %s318 = smul.u32 2, %s24
        %p319 = scmp.lt.s32.totalorder %s23, 1
        %s320 = scalar_select %p319, %s23, 1
        %p321 = scmp.lt.s32.totalorder %s318, 1
        %s322 = scalar_select %p321, %s318, 1
        %s323 = smul.addr %s320, 2
        %s324 = sadd.s32 %s322, %s323
        %s325 = smul.addr %s324, 4
        %s326 = scalar_lea.vmem %s5, %s325
      $region52: #{cross_attention_forward.1} parent=47 // pred_fallthru
        _
    $region48: #{cross_attention_forward.1} parent=5 // pred_fallthru
      _
  $region6: #{cross_attention_forward.1} parent=0 // loop_footer
    %s16 = sadd.s32 1, %s12
  $region7: #{cross_attention_forward.1} parent=0 // loop_footer_branch
    %11 = sbr.rel target = $region3
  $region8: #{cross_attention_forward.1} parent=0 // loop_exit
    _

</llo_original>
